<compile_context>
chip_gen: v6e
topology: v6e:2x2x1
jax: 0.10.0
libtpu: 0.0.40
codegen_flags: <defaults>
</compile_context>

<pallas_src>
import math
import jax
import jax.numpy as jnp
from jax.experimental import pallas as pl
from jax.experimental.pallas import tpu as pltpu


def _round_up(n, m):
    return ((n + m - 1) // m) * m


def householder_net_kernel(x_ref, wslab_ref, cslab_ref, o_ref):
    """Fused forward for one batch tile, batch on the lane axis.

    x_ref:     (Din, tm)        input tile (batch columns)
    wslab_ref: (H, Din+3H+4)    [W1^T | b1 | W2^T | b2 | M | hb | W3^T | b3]
    cslab_ref: (Dout_pad, H+1)  [Wc^T | bc]   (rows >= Dout are zero)
    o_ref:     (Dout_pad, tm)   output tile
    """
    f32 = jnp.float32
    x = x_ref[...].astype(f32)                     # (Din, tm)
    din = x.shape[0]
    H = wslab_ref.shape[0]

    # ---- unpack the packed weight slab with static column slices -------------
    c = 0
    w1t = wslab_ref[:, c:c + din]; c += din        # (H, Din)
    b1 = wslab_ref[:, c:c + 1]; c += 1             # (H, 1)
    w2t = wslab_ref[:, c:c + H]; c += H            # (H, H)
    b2 = wslab_ref[:, c:c + 1]; c += 1
    hm = wslab_ref[:, c:c + H]; c += H             # (H, H) reflection (symmetric)
    hb = wslab_ref[:, c:c + 1]; c += 1
    w3t = wslab_ref[:, c:c + H]; c += H            # (H, H)
    b3 = wslab_ref[:, c:c + 1]; c += 1

    # ---- Linear(Din, H) + ABS -------------------------------------------------
    # Din is tiny (=2): do it as Din broadcast-FMAs on the VPU, lane-dense.
    h = b1 + w1t[:, 0:1] * x[0:1, :]               # (H, tm)
    for k in range(1, din):
        h = h + w1t[:, k:k + 1] * x[k:k + 1, :]
    h = jnp.abs(h)

    # ---- Linear(H, H) + ABS ----------------------------------------------------
    h = jnp.abs(jnp.dot(w2t, h, preferred_element_type=f32) + b2)

    # ---- HouseholderLayer(H) + ABS ---------------------------------------------
    # M = I - 2*vhat*vhat^T precomputed once in the wrapper (M^T == M).
    h = jnp.abs(jnp.dot(hm, h, preferred_element_type=f32) + hb)

    # ---- Linear(H, H) + ABS ----------------------------------------------------
    h = jnp.abs(jnp.dot(w3t, h, preferred_element_type=f32) + b3)

    # ---- classifier Linear(H, Dout_pad) — lane-dense (8, tm) store ---------------
    wct = cslab_ref[:, 0:H]                        # (Dout_pad, H)
    bc = cslab_ref[:, H:H + 1]                     # (Dout_pad, 1)
    o_ref[...] = (jnp.dot(wct, h, preferred_element_type=f32) + bc).astype(o_ref.dtype)


def householder_net(x, params, *, tm=1024):
    """Fused HouseholderNet forward.  Returns a float32 (N, Dout) array."""
    N, Din = x.shape
    H = params["w2"].shape[0]
    Dout = params["wc"].shape[1]
    f32 = jnp.float32

    # --- weight-only precompute (amortized over the whole batch) ------------------
    v = params["hv"].astype(f32)                                # (H, 1)
    vhat = v / (jnp.linalg.norm(v) + 1e-14)                     # torch .norm(p=2) + eps
    hm = jnp.eye(H, dtype=f32) - 2.0 * (vhat @ vhat.T)          # (H, H), symmetric

    # transposed weights / column biases for the batch-on-lanes layout
    w1t = params["w1"].astype(f32).T                            # (H, Din)
    b1 = params["b1"].astype(f32).T                             # (H, 1)
    w2t = params["w2"].astype(f32).T                            # (H, H)
    b2 = params["b2"].astype(f32).T
    hb = params["hb"].astype(f32).T
    w3t = params["w3"].astype(f32).T
    b3 = params["b3"].astype(f32).T

    # pack the hidden-layer operands into one resident slab: (H, Din + 3H + 4)
    wslab = jnp.concatenate([w1t, b1, w2t, b2, hm, hb, w3t, b3], axis=1)

    # classifier packed into a second tiny slab, output padded to 8 sublanes
    Dout_pad = 8
    wct = jnp.zeros((Dout_pad, H), f32).at[:Dout, :].set(params["wc"].astype(f32).T)
    bc = jnp.zeros((Dout_pad, 1), f32).at[:Dout, :].set(params["bc"].astype(f32).T)
    cslab = jnp.concatenate([wct, bc], axis=1)                  # (Dout_pad, H+1)

    # --- batch tiling (batch on lanes -> tm must be a multiple of 128) -------------
    tm = max(128, (int(tm) // 128) * 128)
    # cap at ~half the batch so the grid has >=2 steps (both v7x TCs busy);
    # costs nothing on single-TC v5e/v6e.
    half = _round_up((N + 1) // 2, 128)
    tm = min(tm, max(128, half))
    Npad = _round_up(max(N, tm), tm)

    # transposed, lane-padded input: tiny (Din=2 rows), single fused pad+set
    x_t = jnp.zeros((Din, Npad), f32).at[:, :N].set(x.T.astype(f32))
    grid = (Npad // tm,)

    out_t = pl.pallas_call(
        householder_net_kernel,
        out_shape=jax.ShapeDtypeStruct((Dout_pad, Npad), f32),
        grid=grid,
        in_specs=[
            pl.BlockSpec((Din, tm), lambda i: (0, i)),          # x: tiled over batch lanes
            pl.BlockSpec(wslab.shape, lambda i: (0, 0)),        # resident weight slab
            pl.BlockSpec(cslab.shape, lambda i: (0, 0)),        # resident classifier slab
        ],
        out_specs=pl.BlockSpec((Dout_pad, tm), lambda i: (0, i)),
        compiler_params=pltpu.CompilerParams(dimension_semantics=("parallel",)),
    )(x_t, wslab, cslab)

    # tiny (Dout, N) strip -> (N, Dout); the padded rows/columns are never read
    return out_t[:Dout, :N].T


# ---------------- deterministic parameter init (mirrors nn.init.orthogonal_) ----------------

def _orthogonal(key, out_f, in_f):
    """Orthogonal init for a PyTorch-style (out_f, in_f) weight."""
    a = jax.random.normal(key, (max(out_f, in_f), min(out_f, in_f)), dtype=jnp.float32)
    q, r = jnp.linalg.qr(a)
    q = q * jnp.sign(jnp.diagonal(r))[None, :]
    if out_f < in_f:
        q = q.T
    return q[:out_f, :in_f]


def _linear_bias(key, fan_in, out_f):
    bound = 1.0 / math.sqrt(fan_in)
    return jax.random.uniform(key, (1, out_f), jnp.float32, -bound, bound)


def make_params(key, din=2, hidden=32, dout=2):
    ks = jax.random.split(key, 10)
    # PyTorch Linear weight is (out, in); transpose to (in, out) for x @ W.
    w1 = _orthogonal(ks[0], hidden, din).T          # (din, H)
    b1 = _linear_bias(ks[1], din, hidden)           # (1, H)
    w2 = _orthogonal(ks[2], hidden, hidden).T       # (H, H)
    b2 = _linear_bias(ks[3], hidden, hidden)        # (1, H)
    hv = jax.random.normal(ks[4], (hidden, 1), jnp.float32)   # orthogonal_ on (H,1) == unit column
    hv = hv / jnp.linalg.norm(hv)
    hb_bound = 1.0 / math.sqrt(hidden)
    hb = jax.random.uniform(ks[5], (1, hidden), jnp.float32, -hb_bound, hb_bound)
    w3 = _orthogonal(ks[6], hidden, hidden).T       # (H, H)
    b3 = _linear_bias(ks[7], hidden, hidden)        # (1, H)
    wc = _orthogonal(ks[8], dout, hidden).T         # (H, dout)
    bc = _linear_bias(ks[9], hidden, dout)          # (1, dout)
    return dict(w1=w1, b1=b1, w2=w2, b2=b2, hv=hv, hb=hb, w3=w3, b3=b3, wc=wc, bc=bc)


def householder_net_ref(x, p):
    h = jnp.abs(x @ p["w1"] + p["b1"])
    h = jnp.abs(h @ p["w2"] + p["b2"])
    vhat = p["hv"] / (jnp.linalg.norm(p["hv"]) + 1e-14)
    h = jnp.abs(h - 2.0 * (h @ vhat) * vhat.T + p["hb"])   # HouseholderLayer forward
    h = jnp.abs(h @ p["w3"] + p["b3"])
    return h @ p["wc"] + p["bc"]


if __name__ == "__main__":
    key = jax.random.PRNGKey(0)
    kx, kx2, kp = jax.random.split(key, 3)

    DIN, H, DOUT = 2, 32, 2          # input=2, nnstructure=[32,32,32,32], output=2

    # Main case: tm clamps to 512 -> grid of 2 steps (both v7x TensorCores busy).
    N = 1024
    x = jax.random.normal(kx, (N, DIN), dtype=jnp.float32)
    params = make_params(kp, din=DIN, hidden=H, dout=DOUT)

    out = jax.block_until_ready(householder_net(x, params, tm=1024))
    ref = householder_net_ref(x, params)
    assert out.shape == (N, DOUT)
    assert jnp.allclose(out, ref, atol=1e-4, rtol=1e-4), "Pallas output mismatch vs reference"

    # Tail case: N not a multiple of the tile (exercises the lane-pad + slice path).
    N2 = 1000
    x2 = jax.random.normal(kx2, (N2, DIN), dtype=jnp.float32)
    out2 = jax.block_until_ready(householder_net(x2, params, tm=1024))
    ref2 = householder_net_ref(x2, params)
    assert out2.shape == (N2, DOUT)
    assert jnp.allclose(out2, ref2, atol=1e-4, rtol=1e-4), "Pallas tail-tile mismatch vs reference"

    print("KERNEL_OK")
</pallas_src>

<mosaic_0001>
module attributes {stable_mosaic.version = 11 : i64} {
  func.func @householder_net_kernel(%arg0: i32, %arg1: memref<2x512xf32, #tpu.memory_space<vmem>>, %arg2: memref<32x102xf32, #tpu.memory_space<vmem>>, %arg3: memref<8x33xf32, #tpu.memory_space<vmem>>, %arg4: memref<8x512xf32, #tpu.memory_space<vmem>>) attributes {dimension_semantics = [#tpu.dimension_semantics<parallel>], iteration_bounds = array<i64: 2>, scalar_prefetch = 0 : i64, scratch_operands = 0 : i64, tpu.core_type = #tpu.core_type<tc>, window_params = [{transform_indices = @transform_0, window_bounds = array<i64: 2, 512>}, {pipeline_mode = #tpu.pipeline_mode<synchronous>, transform_indices = @transform_1, window_bounds = array<i64: 32, 102>}, {pipeline_mode = #tpu.pipeline_mode<synchronous>, transform_indices = @transform_2, window_bounds = array<i64: 8, 33>}, {transform_indices = @transform_3, window_bounds = array<i64: 8, 512>}]} {
    %c0 = arith.constant 0 : index
    %c0_0 = arith.constant 0 : index
    %0 = vector.load %arg1[%c0, %c0_0] : memref<2x512xf32, #tpu.memory_space<vmem>>, vector<2x512xf32>
    %c0_1 = arith.constant 0 : index
    %c0_2 = arith.constant 0 : index
    %1 = vector.load %arg2[%c0_1, %c0_2] : memref<32x102xf32, #tpu.memory_space<vmem>>, vector<32x2xf32>
    %c0_3 = arith.constant 0 : index
    %c2 = arith.constant 2 : index
    %2 = vector.load %arg2[%c0_3, %c2] : memref<32x102xf32, #tpu.memory_space<vmem>>, vector<32x1xf32>
    %c0_4 = arith.constant 0 : index
    %c3 = arith.constant 3 : index
    %3 = vector.load %arg2[%c0_4, %c3] : memref<32x102xf32, #tpu.memory_space<vmem>>, vector<32x32xf32>
    %c0_5 = arith.constant 0 : index
    %c35 = arith.constant 35 : index
    %4 = vector.load %arg2[%c0_5, %c35] : memref<32x102xf32, #tpu.memory_space<vmem>>, vector<32x1xf32>
    %c0_6 = arith.constant 0 : index
    %c36 = arith.constant 36 : index
    %5 = vector.load %arg2[%c0_6, %c36] : memref<32x102xf32, #tpu.memory_space<vmem>>, vector<32x32xf32>
    %c0_7 = arith.constant 0 : index
    %c68 = arith.constant 68 : index
    %6 = vector.load %arg2[%c0_7, %c68] : memref<32x102xf32, #tpu.memory_space<vmem>>, vector<32x1xf32>
    %c0_8 = arith.constant 0 : index
    %c69 = arith.constant 69 : index
    %7 = vector.load %arg2[%c0_8, %c69] : memref<32x102xf32, #tpu.memory_space<vmem>>, vector<32x32xf32>
    %c0_9 = arith.constant 0 : index
    %c101 = arith.constant 101 : index
    %8 = vector.load %arg2[%c0_9, %c101] : memref<32x102xf32, #tpu.memory_space<vmem>>, vector<32x1xf32>
    %9 = vector.extract_strided_slice %1 {offsets = [0, 0], sizes = [32, 1], strides = [1, 1]} : vector<32x2xf32> to vector<32x1xf32>
    %10 = vector.extract_strided_slice %0 {offsets = [0, 0], sizes = [1, 512], strides = [1, 1]} : vector<2x512xf32> to vector<1x512xf32>
    %11 = vector.broadcast %9 : vector<32x1xf32> to vector<32x512xf32>
    %12 = vector.broadcast %10 : vector<1x512xf32> to vector<32x512xf32>
    %13 = arith.mulf %11, %12 : vector<32x512xf32>
    %14 = vector.broadcast %2 : vector<32x1xf32> to vector<32x512xf32>
    %15 = arith.addf %14, %13 : vector<32x512xf32>
    %16 = vector.extract_strided_slice %1 {offsets = [0, 1], sizes = [32, 1], strides = [1, 1]} : vector<32x2xf32> to vector<32x1xf32>
    %17 = vector.extract_strided_slice %0 {offsets = [1, 0], sizes = [1, 512], strides = [1, 1]} : vector<2x512xf32> to vector<1x512xf32>
    %18 = vector.broadcast %16 : vector<32x1xf32> to vector<32x512xf32>
    %19 = vector.broadcast %17 : vector<1x512xf32> to vector<32x512xf32>
    %20 = arith.mulf %18, %19 : vector<32x512xf32>
    %21 = arith.addf %15, %20 : vector<32x512xf32>
    %22 = math.absf %21 : vector<32x512xf32>
    %cst = arith.constant dense<0.000000e+00> : vector<32x512xf32>
    %23 = tpu.matmul %3, %22, %cst {dimension_numbers = #tpu.dot_dimension_numbers<[1], [0], [0], [1], [0, 0, 1, 1], [], []>} : vector<32x32xf32>, vector<32x512xf32>, vector<32x512xf32> -> vector<32x512xf32>
    %24 = vector.broadcast %4 : vector<32x1xf32> to vector<32x512xf32>
    %25 = arith.addf %23, %24 : vector<32x512xf32>
    %26 = math.absf %25 : vector<32x512xf32>
    %cst_10 = arith.constant dense<0.000000e+00> : vector<32x512xf32>
    %27 = tpu.matmul %5, %26, %cst_10 {dimension_numbers = #tpu.dot_dimension_numbers<[1], [0], [0], [1], [0, 0, 1, 1], [], []>} : vector<32x32xf32>, vector<32x512xf32>, vector<32x512xf32> -> vector<32x512xf32>
    %28 = vector.broadcast %6 : vector<32x1xf32> to vector<32x512xf32>
    %29 = arith.addf %27, %28 : vector<32x512xf32>
    %30 = math.absf %29 : vector<32x512xf32>
    %cst_11 = arith.constant dense<0.000000e+00> : vector<32x512xf32>
    %31 = tpu.matmul %7, %30, %cst_11 {dimension_numbers = #tpu.dot_dimension_numbers<[1], [0], [0], [1], [0, 0, 1, 1], [], []>} : vector<32x32xf32>, vector<32x512xf32>, vector<32x512xf32> -> vector<32x512xf32>
    %32 = vector.broadcast %8 : vector<32x1xf32> to vector<32x512xf32>
    %33 = arith.addf %31, %32 : vector<32x512xf32>
    %34 = math.absf %33 : vector<32x512xf32>
    %c0_12 = arith.constant 0 : index
    %c0_13 = arith.constant 0 : index
    %35 = vector.load %arg3[%c0_12, %c0_13] : memref<8x33xf32, #tpu.memory_space<vmem>>, vector<8x32xf32>
    %c0_14 = arith.constant 0 : index
    %c32 = arith.constant 32 : index
    %36 = vector.load %arg3[%c0_14, %c32] : memref<8x33xf32, #tpu.memory_space<vmem>>, vector<8x1xf32>
    %cst_15 = arith.constant dense<0.000000e+00> : vector<8x512xf32>
    %37 = tpu.matmul %35, %34, %cst_15 {dimension_numbers = #tpu.dot_dimension_numbers<[1], [0], [0], [1], [0, 0, 1, 1], [], []>} : vector<8x32xf32>, vector<32x512xf32>, vector<8x512xf32> -> vector<8x512xf32>
    %38 = vector.broadcast %36 : vector<8x1xf32> to vector<8x512xf32>
    %39 = arith.addf %37, %38 : vector<8x512xf32>
    %c0_16 = arith.constant 0 : index
    %c0_17 = arith.constant 0 : index
    %40 = vector.load %arg4[%c0_16, %c0_17] : memref<8x512xf32, #tpu.memory_space<vmem>>, vector<8x512xf32>
    tpu.vector_store %arg4[%c0_16, %c0_17], %39 {strides = array<i32>} : memref<8x512xf32, #tpu.memory_space<vmem>>, vector<8x512xf32>,
    return
  }
  func.func @transform_0(%arg0: i32) -> (i32, i32) {
    %c0_i32 = arith.constant 0 : i32
    %c0_i32_0 = arith.constant 0 : i32
    return %c0_i32, %arg0 : i32, i32
  }
  func.func @transform_1(%arg0: i32) -> (i32, i32) {
    %c0_i32 = arith.constant 0 : i32
    %c0_i32_0 = arith.constant 0 : i32
    %c0_i32_1 = arith.constant 0 : i32
    return %c0_i32, %c0_i32_0 : i32, i32
  }
  func.func @transform_2(%arg0: i32) -> (i32, i32) {
    %c0_i32 = arith.constant 0 : i32
    %c0_i32_0 = arith.constant 0 : i32
    %c0_i32_1 = arith.constant 0 : i32
    return %c0_i32, %c0_i32_0 : i32, i32
  }
  func.func @transform_3(%arg0: i32) -> (i32, i32) {
    %c0_i32 = arith.constant 0 : i32
    %c0_i32_0 = arith.constant 0 : i32
    return %c0_i32, %arg0 : i32, i32
  }
}

</mosaic_0001>

<llo_original>
// kernel: tpu_custom_call.1
$region0: #{tpu_custom_call.1}
  #allocation0 [shape = 'u32[]', space=smem, size = 0x4, offset = 0x4, fixed_abs, tag = 'smem constant byte address 0x4 - core index']
  #allocation1 [shape = 'u32[144,128]{1,0:T(1,128)}', space=vmem, size = 0x12000, scoped, tag = 'internal scratch']
  %s0 = inlined_call_operand.hbm [shape: f32[2,1024], index: 0, kind: input, shape index: {}]
  %s1 = inlined_call_operand.hbm [shape: f32[32,102], index: 1, kind: input, shape index: {}]
  %s2 = inlined_call_operand.hbm [shape: f32[8,33], index: 2, kind: input, shape index: {}]
  %s3 = inlined_call_operand.hbm [shape: f32[8,1024], index: 3, kind: output, shape index: {}]
  %s4 = sld [smem:[#allocation0]]
  $region57: #{tpu_custom_call.1} parent=0
    _
  %s6 = ssub.s32 1, %s4
  %s7 = scalar_select 0, %s6, %s4
  $region1: #{tpu_custom_call.1} parent=0
    #allocation2 [shape = 'u8[8192]{0}', space=vmem, size = 0x2000, scoped, tag = 'input window, operand 0']
    #allocation3 [shape = 's32[2]{0}', space=sflag, size = 0x8, scoped, tag = 'scoped memory for tpu_custom_call.1']
    #allocation4 [shape = 's32[2]{0}', space=sflag, size = 0x8, scoped, tag = 'scoped memory for tpu_custom_call.1']
    #allocation5 [shape = 'u8[16384]{0}', space=vmem, size = 0x4000, scoped, tag = 'input window, operand 1, single buffered']
    #allocation6 [shape = 's32[1]{0}', space=sflag, size = 0x4, scoped, tag = 'scoped memory for tpu_custom_call.1']
    #allocation7 [shape = 'u8[4096]{0}', space=vmem, size = 0x1000, scoped, tag = 'input window, operand 2, single buffered']
    #allocation8 [shape = 'u8[32768]{0}', space=vmem, size = 0x8000, scoped, tag = 'output window, operand 0']
    %8 = vsyncpa [#allocation3], 0
    %s9 = scalar_lea.sflag [#allocation3], 1
    %10 = vsyncpa %s9, 0
    %11 = vsyncpa [#allocation6], 0
    %12 = vsyncpa [#allocation4], 0
    %s13 = scalar_lea.sflag [#allocation4], 1
    %14 = vsyncpa %s13, 0
    loop: start=0, step=1, limit=4
    $region2: #{tpu_custom_call.1} parent=1 // loop_pre_header
      _
    $region3: #{tpu_custom_call.1} parent=1 // loop_header
      %s16 = sphi 0, %s20
      %p17 = scmp.ge.s32.totalorder %s16, 4
      %s26 = sphi 0, %s28
      %s29 = sphi 0, %s26
      %s30 = sphi 0, %s29
      %s46 = sphi 0, %s30
      %s50 = sphi 0, %s50
      %s52 = sphi 0, %s50
      %s53 = sphi 0, %s52
      %s67 = sphi 0, %s53
      %s71 = sphi 0, %s71
      %s73 = sphi 0, %s71
      %s74 = sphi 0, %s73
      %s88 = sphi 0, %s74
      %s94 = sphi 0, %s96
      %s97 = sphi 0, %s94
      %s98 = sphi 0, %s97
      %s114 = sphi 0, %s98
    $region4: #{tpu_custom_call.1} parent=1 // loop_header_branch
      %19 = sbr.rel (%p17) target = $region8
    $region5: #{tpu_custom_call.1} parent=1 // loop_body
      %s21 = ssub.s32 %s16, 1
      %s22 = ssub.s32 %s16, 2
      %s23 = sadd.s32 %s16, 1
      %s24 = ssub.s32 %s16, %s23
      %p25 = scmp.eq.s32.totalorder %s24, 0
      %s27 = sadd.s32 %s26, 1
      %s28 = scalar_select %p25, %s26, %s27
      %p31 = pneg %p25
      %p32 = scmp.eq.s32.totalorder %s16, 1
      %p33 = por %p31, %p32
      %p34 = scmp.ne.s32.totalorder %s26, %s29
      %p35 = scmp.eq.s32.totalorder %s16, 0
      %p36 = por %p34, %p35
      %p37 = scmp.ne.s32.totalorder %s26, %s29
      %p38 = scmp.eq.s32.totalorder %s21, 1
      %p39 = por %p37, %p38
      %p40 = scmp.ne.s32.totalorder %s29, %s30
      %p41 = scmp.eq.s32.totalorder %s21, 0
      %p42 = por %p40, %p41
      %p43 = scmp.ne.s32.totalorder %s29, %s30
      %p44 = scmp.eq.s32.totalorder %s22, 1
      %p45 = por %p43, %p44
      %p47 = scmp.ne.s32.totalorder %s30, %s46
      %p48 = scmp.eq.s32.totalorder %s22, 0
      %p49 = por %p47, %p48
      %s51 = sadd.s32 %s50, 1
      %p54 = scmp.eq.s32.totalorder %s16, 1
      %p55 = scmp.ne.s32.totalorder %s50, %s52
      %p56 = scmp.eq.s32.totalorder %s16, 0
      %p57 = por %p55, %p56
      %p58 = scmp.ne.s32.totalorder %s50, %s52
      %p59 = scmp.eq.s32.totalorder %s21, 1
      %p60 = por %p58, %p59
      %p61 = scmp.ne.s32.totalorder %s52, %s53
      %p62 = scmp.eq.s32.totalorder %s21, 0
      %p63 = por %p61, %p62
      %p64 = scmp.ne.s32.totalorder %s52, %s53
      %p65 = scmp.eq.s32.totalorder %s22, 1
      %p66 = por %p64, %p65
      %p68 = scmp.ne.s32.totalorder %s53, %s67
      %p69 = scmp.eq.s32.totalorder %s22, 0
      %p70 = por %p68, %p69
      %s72 = sadd.s32 %s71, 1
      %p75 = scmp.eq.s32.totalorder %s16, 1
      %p76 = scmp.ne.s32.totalorder %s71, %s73
      %p77 = scmp.eq.s32.totalorder %s16, 0
      %p78 = por %p76, %p77
      %p79 = scmp.ne.s32.totalorder %s71, %s73
      %p80 = scmp.eq.s32.totalorder %s21, 1
      %p81 = por %p79, %p80
      %p82 = scmp.ne.s32.totalorder %s73, %s74
      %p83 = scmp.eq.s32.totalorder %s21, 0
      %p84 = por %p82, %p83
      %p85 = scmp.ne.s32.totalorder %s73, %s74
      %p86 = scmp.eq.s32.totalorder %s22, 1
      %p87 = por %p85, %p86
      %p89 = scmp.ne.s32.totalorder %s74, %s88
      %p90 = scmp.eq.s32.totalorder %s22, 0
      %p91 = por %p89, %p90
      %s92 = ssub.s32 %s16, %s23
      %p93 = scmp.eq.s32.totalorder %s92, 0
      %s95 = sadd.s32 %s94, 1
      %s96 = scalar_select %p93, %s94, %s95
      %p99 = pneg %p93
      %p100 = scmp.eq.s32.totalorder %s16, 1
      %p101 = por %p99, %p100
      %p102 = scmp.ne.s32.totalorder %s94, %s97
      %p103 = scmp.eq.s32.totalorder %s16, 0
      %p104 = por %p102, %p103
      %p105 = scmp.ne.s32.totalorder %s94, %s97
      %p106 = scmp.eq.s32.totalorder %s21, 1
      %p107 = por %p105, %p106
      %p108 = scmp.ne.s32.totalorder %s97, %s98
      %p109 = scmp.eq.s32.totalorder %s21, 0
      %p110 = por %p108, %p109
      %p111 = scmp.ne.s32.totalorder %s97, %s98
      %p112 = scmp.eq.s32.totalorder %s22, 1
      %p113 = por %p111, %p112
      %p115 = scmp.ne.s32.totalorder %s98, %s114
      %p116 = scmp.eq.s32.totalorder %s22, 0
      %p117 = por %p115, %p116
      %p118 = scmp.le.s32.totalorder 1, %s16
      %p119 = scmp.lt.s32.totalorder %s16, 3
      %p120 = pnand %p118, %p119
      %p121 = pneg %p120
      // Predicated region
      $region9: #{tpu_custom_call.1} parent=5 // pred_check
        _
      $region10: #{tpu_custom_call.1} parent=5 // pred_check_branch
        %123 = sbr.rel (%p120) target = $region12
      $region11: #{tpu_custom_call.1} parent=5 // pred_region
        %s124 = ssub.s32 %s16, 1
        // Predicated region
        $region13: #{tpu_custom_call.1} parent=11 // pred_check
          %p125 = pneg %p63
        $region14: #{tpu_custom_call.1} parent=11 // pred_check_branch
          %127 = sbr.rel (%p125) target = $region16
        $region15: #{tpu_custom_call.1} parent=11 // pred_region
          %s129 = ssub.s32 512, 512
          %130 = vsyncadd [#allocation6], %s129
          %s131 = sshll.u32 [#allocation5], 4
          %s132 = int_to_ptr.vmem [resolvable:$true] %s131
          %137 = dma.hbm_to_vmem [thread:$0]  %s1, 512, %s132, [#allocation6], 128, 128, 8
        $region16: #{tpu_custom_call.1} parent=11 // pred_fallthru
          _
        // Predicated region
        $region17: #{tpu_custom_call.1} parent=11 // pred_check
          %p138 = pneg %p84
        $region18: #{tpu_custom_call.1} parent=11 // pred_check_branch
          %140 = sbr.rel (%p138) target = $region20
        $region19: #{tpu_custom_call.1} parent=11 // pred_region
          %s142 = ssub.s32 128, 128
          %143 = vsyncadd [#allocation6], %s142
          %s145 = sshll.u32 [#allocation7], 4
          %s146 = int_to_ptr.vmem [resolvable:$true] %s145
          %148 = dma.hbm_to_vmem [thread:$0]  %s2, 128, %s146, [#allocation6]
        $region20: #{tpu_custom_call.1} parent=11 // pred_fallthru
          _
      $region12: #{tpu_custom_call.1} parent=5 // pred_fallthru
        _
      %p149 = scmp.lt.s32.totalorder %s16, 2
      // Predicated region
      $region21: #{tpu_custom_call.1} parent=5 // pred_check
        %p150 = pneg %p149
      $region22: #{tpu_custom_call.1} parent=5 // pred_check_branch
        %152 = sbr.rel (%p150) target = $region24
      $region23: #{tpu_custom_call.1} parent=5 // pred_region
        // Predicated region
        $region25: #{tpu_custom_call.1} parent=23 // pred_check
          %p153 = pneg %p36
        $region26: #{tpu_custom_call.1} parent=23 // pred_check_branch
          %155 = sbr.rel (%p153) target = $region28
        $region27: #{tpu_custom_call.1} parent=23 // pred_region
          %s156 = sand.u32 %s26, 1
          %s157 = scalar_lea.sflag [#allocation3], %s156
          %s158 = sand.u32 %s26, 1
          %s159 = smul.addr %s158, 8
          %s160 = scalar_lea.vmem [#allocation2], %s159
          %s161 = smul.u32 4, %s16
          %s163 = ssub.s32 128, 128
          %164 = vsyncadd %s157, %s163
          %s165 = smul.addr %s161, 32
          %s166 = scalar_lea.hbm %s0, %s165
          %s168 = sshll.u32 %s160, 4
          %s169 = int_to_ptr.vmem [resolvable:$true] %s168
          %171 = dma.hbm_to_vmem [thread:$0]  %s166, 128, %s169, %s157
        $region28: #{tpu_custom_call.1} parent=23 // pred_fallthru
          _
      $region24: #{tpu_custom_call.1} parent=5 // pred_fallthru
        _
      %p172 = scmp.le.s32.totalorder 1, %s16
      %p173 = scmp.lt.s32.totalorder %s16, 3
      %p174 = pnand %p172, %p173
      %p175 = pneg %p174
      // Predicated region
      $region29: #{tpu_custom_call.1} parent=5 // pred_check
        _
      $region30: #{tpu_custom_call.1} parent=5 // pred_check_branch
        %177 = sbr.rel (%p174) target = $region32
      $region31: #{tpu_custom_call.1} parent=5 // pred_region
        %s178 = ssub.s32 %s16, 1
        %s179 = sand.u32 %s29, 1
        %s180 = scalar_lea.sflag [#allocation3], %s179
        %s181 = sand.u32 %s29, 1
        %s182 = smul.addr %s181, 8
        %s183 = scalar_lea.vmem [#allocation2], %s182
        // Predicated region
        $region33: #{tpu_custom_call.1} parent=31 // pred_check
          %p184 = pneg %p42
        $region34: #{tpu_custom_call.1} parent=31 // pred_check_branch
          %186 = sbr.rel (%p184) target = $region36
        $region35: #{tpu_custom_call.1} parent=31 // pred_region
          %187 = dma.done %s180, 128
        $region36: #{tpu_custom_call.1} parent=31 // pred_fallthru
          _
        // Predicated region
        $region37: #{tpu_custom_call.1} parent=31 // pred_check
          %p188 = pneg %p63
        $region38: #{tpu_custom_call.1} parent=31 // pred_check_branch
          %190 = sbr.rel (%p188) target = $region40
        $region39: #{tpu_custom_call.1} parent=31 // pred_region
          %191 = dma.done [#allocation6], 512
        $region40: #{tpu_custom_call.1} parent=31 // pred_fallthru
          _
        // Predicated region
        $region41: #{tpu_custom_call.1} parent=31 // pred_check
          %p192 = pneg %p84
        $region42: #{tpu_custom_call.1} parent=31 // pred_check_branch
          %194 = sbr.rel (%p192) target = $region44
        $region43: #{tpu_custom_call.1} parent=31 // pred_region
          %195 = dma.done [#allocation6], 128
        $region44: #{tpu_custom_call.1} parent=31 // pred_fallthru
          _
        %s196 = sand.u32 %s29, 1
        %s197 = scalar_lea.sflag [#allocation3], %s196
        %s198 = sand.u32 %s29, 1
        %s199 = smul.addr %s198, 8
        %s200 = scalar_lea.vmem [#allocation2], %s199
        %p201 = pneg %p42
        %p202 = pneg %p39
        %p203 = pneg %p63
        %p204 = pneg %p60
        %p205 = pneg %p84
        %p206 = pneg %p81
        %p207 = pneg %p110
        %p208 = pneg %p107
        %s209 = sand.u32 %s97, 1
        %s210 = scalar_lea.sflag [#allocation4], %s209
        %s211 = sand.u32 %s97, 1
        %s212 = smul.addr %s211, 32
        %s213 = scalar_lea.vmem [#allocation8], %s212
        %s214 = smul.u32 4, %s21
        %s215 = smul.u32 4, %s21
        %v216 = vld [vmem:[%s183] sm:$0xff]
        %v217 = vld [vmem:[#allocation5] sm:$0xff]
        %v218 = vld [vmem:[#allocation5 + $0x8] sm:$0xff]
        %v219 = vld [vmem:[#allocation5 + $0x10] sm:$0xff]
        %v220 = vld [vmem:[#allocation5 + $0x18] sm:$0xff]
        %222 = vset.pattern.permute.xlu0 0
        %223 = vperm.xlu0 %222, %v217
        %v224 = vpop.permute.xlu0 %223
        %227 = vset.pattern.permute.xlu0 0
        %228 = vperm.xlu0 %227, %v218
        %v229 = vpop.permute.xlu0 %228
        %232 = vset.pattern.permute.xlu0 0
        %233 = vperm.xlu0 %232, %v219
        %v234 = vpop.permute.xlu0 %233
        %237 = vset.pattern.permute.xlu0 0
        %238 = vperm.xlu0 %237, %v220
        %v239 = vpop.permute.xlu0 %238
        %v242 = vlaneseq
        %v243 = vshrl.u32 %v242, 7
        %v244 = vsub.s32 0, %v243
        %v245 = vrot.slane %v216, %v244
        %v246 = vlaneseq
        %v247 = vshrl.u32 %v246, 7
        %v248 = vsub.s32 2, %v247
        %v249 = vrot.slane %v216, %v248
        %v250 = vlaneseq
        %v251 = vshrl.u32 %v250, 7
        %v252 = vsub.s32 4, %v251
        %v253 = vrot.slane %v216, %v252
        %v254 = vlaneseq
        %v255 = vshrl.u32 %v254, 7
        %v256 = vsub.s32 6, %v255
        %v257 = vrot.slane %v216, %v256
        %v262 = vlaneseq
        %v263 = vshrl.u32 %v262, 7
        %v264 = vsub.s32 0, %v263
        %v265 = vrot.slane %v245, %v264
        %v266 = vlaneseq
        %v267 = vshrl.u32 %v266, 7
        %v268 = vsub.s32 0, %v267
        %v269 = vrot.slane %v249, %v268
        %v270 = vlaneseq
        %v271 = vshrl.u32 %v270, 7
        %v272 = vsub.s32 0, %v271
        %v273 = vrot.slane %v253, %v272
        %v274 = vlaneseq
        %v275 = vshrl.u32 %v274, 7
        %v276 = vsub.s32 0, %v275
        %v277 = vrot.slane %v257, %v276
        %v278 = vmul.f32 %v224, %v265
        %v279 = vmul.f32 %v224, %v269
        %v280 = vmul.f32 %v224, %v273
        %v281 = vmul.f32 %v224, %v277
        %v282 = vmul.f32 %v229, %v265
        %v283 = vmul.f32 %v229, %v269
        %v284 = vmul.f32 %v229, %v273
        %v285 = vmul.f32 %v229, %v277
        %v286 = vmul.f32 %v234, %v265
        %v287 = vmul.f32 %v234, %v269
        %v288 = vmul.f32 %v234, %v273
        %v289 = vmul.f32 %v234, %v277
        %v290 = vmul.f32 %v239, %v265
        %v291 = vmul.f32 %v239, %v269
        %v292 = vmul.f32 %v239, %v273
        %v293 = vmul.f32 %v239, %v277
        %294 = vset.pattern.permute.xlu0 2
        %295 = vperm.xlu0 %294, %v217
        %v296 = vpop.permute.xlu0 %295
        %298 = vset.pattern.permute.xlu0 2
        %299 = vperm.xlu0 %298, %v218
        %v300 = vpop.permute.xlu0 %299
        %302 = vset.pattern.permute.xlu0 2
        %303 = vperm.xlu0 %302, %v219
        %v304 = vpop.permute.xlu0 %303
        %306 = vset.pattern.permute.xlu0 2
        %307 = vperm.xlu0 %306, %v220
        %v308 = vpop.permute.xlu0 %307
        %v310 = vadd.f32 %v296, %v278
        %v311 = vadd.f32 %v296, %v279
        %v312 = vadd.f32 %v296, %v280
        %v313 = vadd.f32 %v296, %v281
        %v314 = vadd.f32 %v300, %v282
        %v315 = vadd.f32 %v300, %v283
        %v316 = vadd.f32 %v300, %v284
        %v317 = vadd.f32 %v300, %v285
        %v318 = vadd.f32 %v304, %v286
        %v319 = vadd.f32 %v304, %v287
        %v320 = vadd.f32 %v304, %v288
        %v321 = vadd.f32 %v304, %v289
        %v322 = vadd.f32 %v308, %v290
        %v323 = vadd.f32 %v308, %v291
        %v324 = vadd.f32 %v308, %v292
        %v325 = vadd.f32 %v308, %v293
        %326 = vset.pattern.permute.xlu0 1
        %327 = vperm.xlu0 %326, %v217
        %v328 = vpop.permute.xlu0 %327
        %330 = vset.pattern.permute.xlu0 1
        %331 = vperm.xlu0 %330, %v218
        %v332 = vpop.permute.xlu0 %331
        %334 = vset.pattern.permute.xlu0 1
        %335 = vperm.xlu0 %334, %v219
        %v336 = vpop.permute.xlu0 %335
        %338 = vset.pattern.permute.xlu0 1
        %339 = vperm.xlu0 %338, %v220
        %v340 = vpop.permute.xlu0 %339
        %v342 = vlaneseq
        %v343 = vshrl.u32 %v342, 7
        %v344 = vsub.s32 1, %v343
        %v345 = vrot.slane %v216, %v344
        %v346 = vlaneseq
        %v347 = vshrl.u32 %v346, 7
        %v348 = vsub.s32 3, %v347
        %v349 = vrot.slane %v216, %v348
        %v350 = vlaneseq
        %v351 = vshrl.u32 %v350, 7
        %v352 = vsub.s32 5, %v351
        %v353 = vrot.slane %v216, %v352
        %v354 = vlaneseq
        %v355 = vshrl.u32 %v354, 7
        %v356 = vsub.s32 7, %v355
        %v357 = vrot.slane %v216, %v356
        %v362 = vlaneseq
        %v363 = vshrl.u32 %v362, 7
        %v364 = vsub.s32 1, %v363
        %v365 = vrot.slane %v345, %v364
        %v366 = vlaneseq
        %v367 = vshrl.u32 %v366, 7
        %v368 = vsub.s32 1, %v367
        %v369 = vrot.slane %v349, %v368
        %v370 = vlaneseq
        %v371 = vshrl.u32 %v370, 7
        %v372 = vsub.s32 1, %v371
        %v373 = vrot.slane %v353, %v372
        %v374 = vlaneseq
        %v375 = vshrl.u32 %v374, 7
        %v376 = vsub.s32 1, %v375
        %v377 = vrot.slane %v357, %v376
        %v378 = vmul.f32 %v328, %v365
        %v379 = vmul.f32 %v328, %v369
        %v380 = vmul.f32 %v328, %v373
        %v381 = vmul.f32 %v328, %v377
        %v382 = vmul.f32 %v332, %v365
        %v383 = vmul.f32 %v332, %v369
        %v384 = vmul.f32 %v332, %v373
        %v385 = vmul.f32 %v332, %v377
        %v386 = vmul.f32 %v336, %v365
        %v387 = vmul.f32 %v336, %v369
        %v388 = vmul.f32 %v336, %v373
        %v389 = vmul.f32 %v336, %v377
        %v390 = vmul.f32 %v340, %v365
        %v391 = vmul.f32 %v340, %v369
        %v392 = vmul.f32 %v340, %v373
        %v393 = vmul.f32 %v340, %v377
        %v394 = vadd.f32 %v310, %v378
        %v395 = vadd.f32 %v311, %v379
        %v396 = vadd.f32 %v312, %v380
        %v397 = vadd.f32 %v313, %v381
        %v398 = vadd.f32 %v314, %v382
        %v399 = vadd.f32 %v315, %v383
        %v400 = vadd.f32 %v316, %v384
        %v401 = vadd.f32 %v317, %v385
        %v402 = vadd.f32 %v318, %v386
        %v403 = vadd.f32 %v319, %v387
        %v404 = vadd.f32 %v320, %v388
        %v405 = vadd.f32 %v321, %v389
        %v406 = vadd.f32 %v322, %v390
        %v407 = vadd.f32 %v323, %v391
        %v408 = vadd.f32 %v324, %v392
        %v409 = vadd.f32 %v325, %v393
        %v410 = vand.u32 2147483647, %v394
        %v411 = vand.u32 2147483647, %v395
        %v412 = vand.u32 2147483647, %v396
        %v413 = vand.u32 2147483647, %v397
        %v414 = vand.u32 2147483647, %v398
        %v415 = vand.u32 2147483647, %v399
        %v416 = vand.u32 2147483647, %v400
        %v417 = vand.u32 2147483647, %v401
        %v418 = vand.u32 2147483647, %v402
        %v419 = vand.u32 2147483647, %v403
        %v420 = vand.u32 2147483647, %v404
        %v421 = vand.u32 2147483647, %v405
        %v422 = vand.u32 2147483647, %v406
        %v423 = vand.u32 2147483647, %v407
        %v424 = vand.u32 2147483647, %v408
        %v425 = vand.u32 2147483647, %v409
        %426 = vset.pattern.permute.xlu0 35
        %427 = vperm.xlu0 %426, %v217
        %v428 = vpop.permute.xlu0 %427
        %430 = vset.pattern.permute.xlu0 35
        %431 = vperm.xlu0 %430, %v218
        %v432 = vpop.permute.xlu0 %431
        %434 = vset.pattern.permute.xlu0 35
        %435 = vperm.xlu0 %434, %v219
        %v436 = vpop.permute.xlu0 %435
        %438 = vset.pattern.permute.xlu0 35
        %439 = vperm.xlu0 %438, %v220
        %v440 = vpop.permute.xlu0 %439
        %442 = vrot.lane.b32.xlu0 %v217, 125
        %v443 = vpop.permute.xlu0 %442
        %444 = vrot.lane.b32.xlu0 %v218, 125
        %v445 = vpop.permute.xlu0 %444
        %446 = vrot.lane.b32.xlu0 %v219, 125
        %v447 = vpop.permute.xlu0 %446
        %448 = vrot.lane.b32.xlu0 %v220, 125
        %v449 = vpop.permute.xlu0 %448
        %vm450 = vcmask 261120
        %v451 = vsel %vm450, %v443, 0
        %v453 = vsel %vm450, %v445, 0
        %v455 = vsel %vm450, %v447, 0
        %v457 = vsel %vm450, %v449, 0
        %459 = vmatprep.subr.mxu0 0.0
        %460 = vmatpush1.msra.mxu0 0.0
        %461 = vmatprep.subr.mxu0 0.0
        %462 = vmatpush1.msra.mxu0 0.0
        %463 = vmatprep.subr.mxu0 0.0
        %464 = vmatpush1.msra.mxu0 0.0
        %465 = vmatprep.subr.mxu0 0.0
        %466 = vmatpush1.msra.mxu0 0.0
        %467 = vmatprep.subr.mxu0 0.0
        %468 = vmatpush1.msra.mxu0 0.0
        %469 = vmatprep.subr.mxu0 0.0
        %470 = vmatpush1.msra.mxu0 0.0
        %471 = vmatprep.subr.mxu0 0.0
        %472 = vmatpush1.msra.mxu0 0.0
        %473 = vmatprep.subr.mxu0 0.0
        %474 = vmatpush1.msra.mxu0 0.0
        %475 = vmatprep.subr.mxu0 0.0
        %476 = vmatpush1.msra.mxu0 0.0
        %477 = vmatprep.subr.mxu0 0.0
        %478 = vmatpush1.msra.mxu0 0.0
        %479 = vmatprep.subr.mxu0 0.0
        %480 = vmatpush1.msra.mxu0 0.0
        %481 = vmatprep.subr.mxu0 0.0
        %482 = vmatpush1.msra.mxu0 0.0
        %483 = vmatprep.subr.mxu0 %v423
        %484 = vmatpush1.msra.mxu0 %v422
        %485 = vmatprep.subr.mxu0 %v419
        %486 = vmatpush1.msra.mxu0 %v418
        %487 = vmatprep.subr.mxu0 %v415
        %488 = vmatpush1.msra.mxu0 %v414
        %489 = vmatprep.subr.mxu0 %v411
        %490 = vmatpush1.msra.mxu0 %v410
        %491 = vmatprep.subr.mxu0 0.0
        %492 = vmatpush2.msra.mxu0 0.0
        %493 = vmatprep.subr.mxu0 0.0
        %494 = vmatpush2.msra.mxu0 0.0
        %495 = vmatprep.subr.mxu0 0.0
        %496 = vmatpush2.msra.mxu0 0.0
        %497 = vmatprep.subr.mxu0 0.0
        %498 = vmatpush2.msra.mxu0 0.0
        %499 = vmatprep.subr.mxu0 0.0
        %500 = vmatpush2.msra.mxu0 0.0
        %501 = vmatprep.subr.mxu0 0.0
        %502 = vmatpush2.msra.mxu0 0.0
        %503 = vmatprep.subr.mxu0 0.0
        %504 = vmatpush2.msra.mxu0 0.0
        %505 = vmatprep.subr.mxu0 0.0
        %506 = vmatpush2.msra.mxu0 0.0
        %507 = vmatprep.subr.mxu0 0.0
        %508 = vmatpush2.msra.mxu0 0.0
        %509 = vmatprep.subr.mxu0 0.0
        %510 = vmatpush2.msra.mxu0 0.0
        %511 = vmatprep.subr.mxu0 0.0
        %512 = vmatpush2.msra.mxu0 0.0
        %513 = vmatprep.subr.mxu0 0.0
        %514 = vmatpush2.msra.mxu0 0.0
        %515 = vmatprep.subr.mxu0 0.0
        %516 = vmatpush2.msra.mxu0 0.0
        %517 = vmatprep.subr.mxu0 0.0
        %518 = vmatpush2.msra.mxu0 0.0
        %519 = vmatprep.subr.mxu0 0.0
        %520 = vmatpush2.msra.mxu0 0.0
        %521 = vmatprep.subr.mxu0 0.0
        %522 = vmatpush2.msra.mxu0 0.0
        %523 = vmatprep.mubr.f32.mxu0 0.0
        %524 = vmatmul.mubr.f32.gmra.mxu0 %v451
        %v525 = vpop.f32.mrf.mxu0
        %v526 = vadd.f32 %v428, %v525
        %v527 = vpop.f32.mrf.mxu0
        %v528 = vadd.f32 %v428, %v527
        %529 = vmatprep.mubr.f32.mxu0 0.0
        %530 = vmatmul.mubr.f32.gmra.mxu0 %v453
        %v531 = vpop.f32.mrf.mxu0
        %v532 = vadd.f32 %v432, %v531
        %v533 = vpop.f32.mrf.mxu0
        %v534 = vadd.f32 %v432, %v533
        %535 = vmatprep.mubr.f32.mxu0 0.0
        %536 = vmatmul.mubr.f32.gmra.mxu0 %v455
        %v537 = vpop.f32.mrf.mxu0
        %v538 = vadd.f32 %v436, %v537
        %v539 = vpop.f32.mrf.mxu0
        %v540 = vadd.f32 %v436, %v539
        %541 = vmatprep.mubr.f32.mxu0 0.0
        %542 = vmatmul.mubr.f32.gmra.mxu0 %v457
        %v543 = vpop.f32.mrf.mxu0
        %v544 = vadd.f32 %v440, %v543
        %v545 = vpop.f32.mrf.mxu0
        %v546 = vadd.f32 %v440, %v545
        %547 = vdwg.mxu0
        %548 = vmatprep.subr.mxu0 0.0
        %549 = vmatpush1.msra.mxu0 0.0
        %550 = vmatprep.subr.mxu0 0.0
        %551 = vmatpush1.msra.mxu0 0.0
        %552 = vmatprep.subr.mxu0 0.0
        %553 = vmatpush1.msra.mxu0 0.0
        %554 = vmatprep.subr.mxu0 0.0
        %555 = vmatpush1.msra.mxu0 0.0
        %556 = vmatprep.subr.mxu0 0.0
        %557 = vmatpush1.msra.mxu0 0.0
        %558 = vmatprep.subr.mxu0 0.0
        %559 = vmatpush1.msra.mxu0 0.0
        %560 = vmatprep.subr.mxu0 0.0
        %561 = vmatpush1.msra.mxu0 0.0
        %562 = vmatprep.subr.mxu0 0.0
        %563 = vmatpush1.msra.mxu0 0.0
        %564 = vmatprep.subr.mxu0 0.0
        %565 = vmatpush1.msra.mxu0 0.0
        %566 = vmatprep.subr.mxu0 0.0
        %567 = vmatpush1.msra.mxu0 0.0
        %568 = vmatprep.subr.mxu0 0.0
        %569 = vmatpush1.msra.mxu0 0.0
        %570 = vmatprep.subr.mxu0 0.0
        %571 = vmatpush1.msra.mxu0 0.0
        %572 = vmatprep.subr.mxu0 %v425
        %573 = vmatpush1.msra.mxu0 %v424
        %574 = vmatprep.subr.mxu0 %v421
        %575 = vmatpush1.msra.mxu0 %v420
        %576 = vmatprep.subr.mxu0 %v417
        %577 = vmatpush1.msra.mxu0 %v416
        %578 = vmatprep.subr.mxu0 %v413
        %579 = vmatpush1.msra.mxu0 %v412
        %580 = vmatprep.subr.mxu0 0.0
        %581 = vmatpush2.msra.mxu0 0.0
        %582 = vmatprep.subr.mxu0 0.0
        %583 = vmatpush2.msra.mxu0 0.0
        %584 = vmatprep.subr.mxu0 0.0
        %585 = vmatpush2.msra.mxu0 0.0
        %586 = vmatprep.subr.mxu0 0.0
        %587 = vmatpush2.msra.mxu0 0.0
        %588 = vmatprep.subr.mxu0 0.0
        %589 = vmatpush2.msra.mxu0 0.0
        %590 = vmatprep.subr.mxu0 0.0
        %591 = vmatpush2.msra.mxu0 0.0
        %592 = vmatprep.subr.mxu0 0.0
        %593 = vmatpush2.msra.mxu0 0.0
        %594 = vmatprep.subr.mxu0 0.0
        %595 = vmatpush2.msra.mxu0 0.0
        %596 = vmatprep.subr.mxu0 0.0
        %597 = vmatpush2.msra.mxu0 0.0
        %598 = vmatprep.subr.mxu0 0.0
        %599 = vmatpush2.msra.mxu0 0.0
        %600 = vmatprep.subr.mxu0 0.0
        %601 = vmatpush2.msra.mxu0 0.0
        %602 = vmatprep.subr.mxu0 0.0
        %603 = vmatpush2.msra.mxu0 0.0
        %604 = vmatprep.subr.mxu0 0.0
        %605 = vmatpush2.msra.mxu0 0.0
        %606 = vmatprep.subr.mxu0 0.0
        %607 = vmatpush2.msra.mxu0 0.0
        %608 = vmatprep.subr.mxu0 0.0
        %609 = vmatpush2.msra.mxu0 0.0
        %610 = vmatprep.subr.mxu0 0.0
        %611 = vmatpush2.msra.mxu0 0.0
        %612 = vmatprep.mubr.f32.mxu0 0.0
        %613 = vmatmul.mubr.f32.gmra.mxu0 %v451
        %v614 = vpop.f32.mrf.mxu0
        %v615 = vadd.f32 %v428, %v614
        %v616 = vpop.f32.mrf.mxu0
        %v617 = vadd.f32 %v428, %v616
        %618 = vmatprep.mubr.f32.mxu0 0.0
        %619 = vmatmul.mubr.f32.gmra.mxu0 %v453
        %v620 = vpop.f32.mrf.mxu0
        %v621 = vadd.f32 %v432, %v620
        %v622 = vpop.f32.mrf.mxu0
        %v623 = vadd.f32 %v432, %v622
        %624 = vmatprep.mubr.f32.mxu0 0.0
        %625 = vmatmul.mubr.f32.gmra.mxu0 %v455
        %v626 = vpop.f32.mrf.mxu0
        %v627 = vadd.f32 %v436, %v626
        %v628 = vpop.f32.mrf.mxu0
        %v629 = vadd.f32 %v436, %v628
        %630 = vmatprep.mubr.f32.mxu0 0.0
        %631 = vmatmul.mubr.f32.gmra.mxu0 %v457
        %v632 = vpop.f32.mrf.mxu0
        %v633 = vadd.f32 %v440, %v632
        %v634 = vpop.f32.mrf.mxu0
        %v635 = vadd.f32 %v440, %v634
        %636 = vdwg.mxu0
        %v637 = vand.u32 2147483647, %v526
        %v638 = vand.u32 2147483647, %v528
        %v639 = vand.u32 2147483647, %v615
        %v640 = vand.u32 2147483647, %v617
        %v641 = vand.u32 2147483647, %v532
        %v642 = vand.u32 2147483647, %v534
        %v643 = vand.u32 2147483647, %v621
        %v644 = vand.u32 2147483647, %v623
        %v645 = vand.u32 2147483647, %v538
        %v646 = vand.u32 2147483647, %v540
        %v647 = vand.u32 2147483647, %v627
        %v648 = vand.u32 2147483647, %v629
        %v649 = vand.u32 2147483647, %v544
        %v650 = vand.u32 2147483647, %v546
        %v651 = vand.u32 2147483647, %v633
        %v652 = vand.u32 2147483647, %v635
        %653 = vset.pattern.permute.xlu0 68
        %654 = vperm.xlu0 %653, %v217
        %v655 = vpop.permute.xlu0 %654
        %657 = vset.pattern.permute.xlu0 68
        %658 = vperm.xlu0 %657, %v218
        %v659 = vpop.permute.xlu0 %658
        %661 = vset.pattern.permute.xlu0 68
        %662 = vperm.xlu0 %661, %v219
        %v663 = vpop.permute.xlu0 %662
        %665 = vset.pattern.permute.xlu0 68
        %666 = vperm.xlu0 %665, %v220
        %v667 = vpop.permute.xlu0 %666
        %669 = vrot.lane.b32.xlu0 %v217, 92
        %v670 = vpop.permute.xlu0 %669
        %671 = vrot.lane.b32.xlu0 %v218, 92
        %v672 = vpop.permute.xlu0 %671
        %673 = vrot.lane.b32.xlu0 %v219, 92
        %v674 = vpop.permute.xlu0 %673
        %675 = vrot.lane.b32.xlu0 %v220, 92
        %v676 = vpop.permute.xlu0 %675
        %v677 = vsel %vm450, %v670, 0
        %v679 = vsel %vm450, %v672, 0
        %v681 = vsel %vm450, %v674, 0
        %v683 = vsel %vm450, %v676, 0
        %685 = vmatprep.subr.mxu0 0.0
        %686 = vmatpush1.msra.mxu0 0.0
        %687 = vmatprep.subr.mxu0 0.0
        %688 = vmatpush1.msra.mxu0 0.0
        %689 = vmatprep.subr.mxu0 0.0
        %690 = vmatpush1.msra.mxu0 0.0
        %691 = vmatprep.subr.mxu0 0.0
        %692 = vmatpush1.msra.mxu0 0.0
        %693 = vmatprep.subr.mxu0 0.0
        %694 = vmatpush1.msra.mxu0 0.0
        %695 = vmatprep.subr.mxu0 0.0
        %696 = vmatpush1.msra.mxu0 0.0
        %697 = vmatprep.subr.mxu0 0.0
        %698 = vmatpush1.msra.mxu0 0.0
        %699 = vmatprep.subr.mxu0 0.0
        %700 = vmatpush1.msra.mxu0 0.0
        %701 = vmatprep.subr.mxu0 0.0
        %702 = vmatpush1.msra.mxu0 0.0
        %703 = vmatprep.subr.mxu0 0.0
        %704 = vmatpush1.msra.mxu0 0.0
        %705 = vmatprep.subr.mxu0 0.0
        %706 = vmatpush1.msra.mxu0 0.0
        %707 = vmatprep.subr.mxu0 0.0
        %708 = vmatpush1.msra.mxu0 0.0
        %709 = vmatprep.subr.mxu0 %v650
        %710 = vmatpush1.msra.mxu0 %v649
        %711 = vmatprep.subr.mxu0 %v646
        %712 = vmatpush1.msra.mxu0 %v645
        %713 = vmatprep.subr.mxu0 %v642
        %714 = vmatpush1.msra.mxu0 %v641
        %715 = vmatprep.subr.mxu0 %v638
        %716 = vmatpush1.msra.mxu0 %v637
        %717 = vmatprep.subr.mxu0 0.0
        %718 = vmatpush2.msra.mxu0 0.0
        %719 = vmatprep.subr.mxu0 0.0
        %720 = vmatpush2.msra.mxu0 0.0
        %721 = vmatprep.subr.mxu0 0.0
        %722 = vmatpush2.msra.mxu0 0.0
        %723 = vmatprep.subr.mxu0 0.0
        %724 = vmatpush2.msra.mxu0 0.0
        %725 = vmatprep.subr.mxu0 0.0
        %726 = vmatpush2.msra.mxu0 0.0
        %727 = vmatprep.subr.mxu0 0.0
        %728 = vmatpush2.msra.mxu0 0.0
        %729 = vmatprep.subr.mxu0 0.0
        %730 = vmatpush2.msra.mxu0 0.0
        %731 = vmatprep.subr.mxu0 0.0
        %732 = vmatpush2.msra.mxu0 0.0
        %733 = vmatprep.subr.mxu0 0.0
        %734 = vmatpush2.msra.mxu0 0.0
        %735 = vmatprep.subr.mxu0 0.0
        %736 = vmatpush2.msra.mxu0 0.0
        %737 = vmatprep.subr.mxu0 0.0
        %738 = vmatpush2.msra.mxu0 0.0
        %739 = vmatprep.subr.mxu0 0.0
        %740 = vmatpush2.msra.mxu0 0.0
        %741 = vmatprep.subr.mxu0 0.0
        %742 = vmatpush2.msra.mxu0 0.0
        %743 = vmatprep.subr.mxu0 0.0
        %744 = vmatpush2.msra.mxu0 0.0
        %745 = vmatprep.subr.mxu0 0.0
        %746 = vmatpush2.msra.mxu0 0.0
        %747 = vmatprep.subr.mxu0 0.0
        %748 = vmatpush2.msra.mxu0 0.0
        %749 = vmatprep.mubr.f32.mxu0 0.0
        %750 = vmatmul.mubr.f32.gmra.mxu0 %v677
        %v751 = vpop.f32.mrf.mxu0
        %v752 = vadd.f32 %v655, %v751
        %v753 = vpop.f32.mrf.mxu0
        %v754 = vadd.f32 %v655, %v753
        %755 = vmatprep.mubr.f32.mxu0 0.0
        %756 = vmatmul.mubr.f32.gmra.mxu0 %v679
        %v757 = vpop.f32.mrf.mxu0
        %v758 = vadd.f32 %v659, %v757
        %v759 = vpop.f32.mrf.mxu0
        %v760 = vadd.f32 %v659, %v759
        %761 = vmatprep.mubr.f32.mxu0 0.0
        %762 = vmatmul.mubr.f32.gmra.mxu0 %v681
        %v763 = vpop.f32.mrf.mxu0
        %v764 = vadd.f32 %v663, %v763
        %v765 = vpop.f32.mrf.mxu0
        %v766 = vadd.f32 %v663, %v765
        %767 = vmatprep.mubr.f32.mxu0 0.0
        %768 = vmatmul.mubr.f32.gmra.mxu0 %v683
        %v769 = vpop.f32.mrf.mxu0
        %v770 = vadd.f32 %v667, %v769
        %v771 = vpop.f32.mrf.mxu0
        %v772 = vadd.f32 %v667, %v771
        %773 = vdwg.mxu0
        %774 = vmatprep.subr.mxu0 0.0
        %775 = vmatpush1.msra.mxu0 0.0
        %776 = vmatprep.subr.mxu0 0.0
        %777 = vmatpush1.msra.mxu0 0.0
        %778 = vmatprep.subr.mxu0 0.0
        %779 = vmatpush1.msra.mxu0 0.0
        %780 = vmatprep.subr.mxu0 0.0
        %781 = vmatpush1.msra.mxu0 0.0
        %782 = vmatprep.subr.mxu0 0.0
        %783 = vmatpush1.msra.mxu0 0.0
        %784 = vmatprep.subr.mxu0 0.0
        %785 = vmatpush1.msra.mxu0 0.0
        %786 = vmatprep.subr.mxu0 0.0
        %787 = vmatpush1.msra.mxu0 0.0
        %788 = vmatprep.subr.mxu0 0.0
        %789 = vmatpush1.msra.mxu0 0.0
        %790 = vmatprep.subr.mxu0 0.0
        %791 = vmatpush1.msra.mxu0 0.0
        %792 = vmatprep.subr.mxu0 0.0
        %793 = vmatpush1.msra.mxu0 0.0
        %794 = vmatprep.subr.mxu0 0.0
        %795 = vmatpush1.msra.mxu0 0.0
        %796 = vmatprep.subr.mxu0 0.0
        %797 = vmatpush1.msra.mxu0 0.0
        %798 = vmatprep.subr.mxu0 %v652
        %799 = vmatpush1.msra.mxu0 %v651
        %800 = vmatprep.subr.mxu0 %v648
        %801 = vmatpush1.msra.mxu0 %v647
        %802 = vmatprep.subr.mxu0 %v644
        %803 = vmatpush1.msra.mxu0 %v643
        %804 = vmatprep.subr.mxu0 %v640
        %805 = vmatpush1.msra.mxu0 %v639
        %806 = vmatprep.subr.mxu0 0.0
        %807 = vmatpush2.msra.mxu0 0.0
        %808 = vmatprep.subr.mxu0 0.0
        %809 = vmatpush2.msra.mxu0 0.0
        %810 = vmatprep.subr.mxu0 0.0
        %811 = vmatpush2.msra.mxu0 0.0
        %812 = vmatprep.subr.mxu0 0.0
        %813 = vmatpush2.msra.mxu0 0.0
        %814 = vmatprep.subr.mxu0 0.0
        %815 = vmatpush2.msra.mxu0 0.0
        %816 = vmatprep.subr.mxu0 0.0
        %817 = vmatpush2.msra.mxu0 0.0
        %818 = vmatprep.subr.mxu0 0.0
        %819 = vmatpush2.msra.mxu0 0.0
        %820 = vmatprep.subr.mxu0 0.0
        %821 = vmatpush2.msra.mxu0 0.0
        %822 = vmatprep.subr.mxu0 0.0
        %823 = vmatpush2.msra.mxu0 0.0
        %824 = vmatprep.subr.mxu0 0.0
        %825 = vmatpush2.msra.mxu0 0.0
        %826 = vmatprep.subr.mxu0 0.0
        %827 = vmatpush2.msra.mxu0 0.0
        %828 = vmatprep.subr.mxu0 0.0
        %829 = vmatpush2.msra.mxu0 0.0
        %830 = vmatprep.subr.mxu0 0.0
        %831 = vmatpush2.msra.mxu0 0.0
        %832 = vmatprep.subr.mxu0 0.0
        %833 = vmatpush2.msra.mxu0 0.0
        %834 = vmatprep.subr.mxu0 0.0
        %835 = vmatpush2.msra.mxu0 0.0
        %836 = vmatprep.subr.mxu0 0.0
        %837 = vmatpush2.msra.mxu0 0.0
        %838 = vmatprep.mubr.f32.mxu0 0.0
        %839 = vmatmul.mubr.f32.gmra.mxu0 %v677
        %v840 = vpop.f32.mrf.mxu0
        %v841 = vadd.f32 %v655, %v840
        %v842 = vpop.f32.mrf.mxu0
        %v843 = vadd.f32 %v655, %v842
        %844 = vmatprep.mubr.f32.mxu0 0.0
        %845 = vmatmul.mubr.f32.gmra.mxu0 %v679
        %v846 = vpop.f32.mrf.mxu0
        %v847 = vadd.f32 %v659, %v846
        %v848 = vpop.f32.mrf.mxu0
        %v849 = vadd.f32 %v659, %v848
        %850 = vmatprep.mubr.f32.mxu0 0.0
        %851 = vmatmul.mubr.f32.gmra.mxu0 %v681
        %v852 = vpop.f32.mrf.mxu0
        %v853 = vadd.f32 %v663, %v852
        %v854 = vpop.f32.mrf.mxu0
        %v855 = vadd.f32 %v663, %v854
        %856 = vmatprep.mubr.f32.mxu0 0.0
        %857 = vmatmul.mubr.f32.gmra.mxu0 %v683
        %v858 = vpop.f32.mrf.mxu0
        %v859 = vadd.f32 %v667, %v858
        %v860 = vpop.f32.mrf.mxu0
        %v861 = vadd.f32 %v667, %v860
        %862 = vdwg.mxu0
        %v863 = vand.u32 2147483647, %v752
        %v864 = vand.u32 2147483647, %v754
        %v865 = vand.u32 2147483647, %v841
        %v866 = vand.u32 2147483647, %v843
        %v867 = vand.u32 2147483647, %v758
        %v868 = vand.u32 2147483647, %v760
        %v869 = vand.u32 2147483647, %v847
        %v870 = vand.u32 2147483647, %v849
        %v871 = vand.u32 2147483647, %v764
        %v872 = vand.u32 2147483647, %v766
        %v873 = vand.u32 2147483647, %v853
        %v874 = vand.u32 2147483647, %v855
        %v875 = vand.u32 2147483647, %v770
        %v876 = vand.u32 2147483647, %v772
        %v877 = vand.u32 2147483647, %v859
        %v878 = vand.u32 2147483647, %v861
        %879 = vset.pattern.permute.xlu0 101
        %880 = vperm.xlu0 %879, %v217
        %v881 = vpop.permute.xlu0 %880
        %883 = vset.pattern.permute.xlu0 101
        %884 = vperm.xlu0 %883, %v218
        %v885 = vpop.permute.xlu0 %884
        %887 = vset.pattern.permute.xlu0 101
        %888 = vperm.xlu0 %887, %v219
        %v889 = vpop.permute.xlu0 %888
        %891 = vset.pattern.permute.xlu0 101
        %892 = vperm.xlu0 %891, %v220
        %v893 = vpop.permute.xlu0 %892
        %895 = vrot.lane.b32.xlu0 %v217, 59
        %v896 = vpop.permute.xlu0 %895
        %897 = vrot.lane.b32.xlu0 %v218, 59
        %v898 = vpop.permute.xlu0 %897
        %899 = vrot.lane.b32.xlu0 %v219, 59
        %v900 = vpop.permute.xlu0 %899
        %901 = vrot.lane.b32.xlu0 %v220, 59
        %v902 = vpop.permute.xlu0 %901
        %v903 = vsel %vm450, %v896, 0
        %v905 = vsel %vm450, %v898, 0
        %v907 = vsel %vm450, %v900, 0
        %v909 = vsel %vm450, %v902, 0
        %911 = vmatprep.subr.mxu0 0.0
        %912 = vmatpush1.msra.mxu0 0.0
        %913 = vmatprep.subr.mxu0 0.0
        %914 = vmatpush1.msra.mxu0 0.0
        %915 = vmatprep.subr.mxu0 0.0
        %916 = vmatpush1.msra.mxu0 0.0
        %917 = vmatprep.subr.mxu0 0.0
        %918 = vmatpush1.msra.mxu0 0.0
        %919 = vmatprep.subr.mxu0 0.0
        %920 = vmatpush1.msra.mxu0 0.0
        %921 = vmatprep.subr.mxu0 0.0
        %922 = vmatpush1.msra.mxu0 0.0
        %923 = vmatprep.subr.mxu0 0.0
        %924 = vmatpush1.msra.mxu0 0.0
        %925 = vmatprep.subr.mxu0 0.0
        %926 = vmatpush1.msra.mxu0 0.0
        %927 = vmatprep.subr.mxu0 0.0
        %928 = vmatpush1.msra.mxu0 0.0
        %929 = vmatprep.subr.mxu0 0.0
        %930 = vmatpush1.msra.mxu0 0.0
        %931 = vmatprep.subr.mxu0 0.0
        %932 = vmatpush1.msra.mxu0 0.0
        %933 = vmatprep.subr.mxu0 0.0
        %934 = vmatpush1.msra.mxu0 0.0
        %935 = vmatprep.subr.mxu0 %v876
        %936 = vmatpush1.msra.mxu0 %v875
        %937 = vmatprep.subr.mxu0 %v872
        %938 = vmatpush1.msra.mxu0 %v871
        %939 = vmatprep.subr.mxu0 %v868
        %940 = vmatpush1.msra.mxu0 %v867
        %941 = vmatprep.subr.mxu0 %v864
        %942 = vmatpush1.msra.mxu0 %v863
        %943 = vmatprep.subr.mxu0 0.0
        %944 = vmatpush2.msra.mxu0 0.0
        %945 = vmatprep.subr.mxu0 0.0
        %946 = vmatpush2.msra.mxu0 0.0
        %947 = vmatprep.subr.mxu0 0.0
        %948 = vmatpush2.msra.mxu0 0.0
        %949 = vmatprep.subr.mxu0 0.0
        %950 = vmatpush2.msra.mxu0 0.0
        %951 = vmatprep.subr.mxu0 0.0
        %952 = vmatpush2.msra.mxu0 0.0
        %953 = vmatprep.subr.mxu0 0.0
        %954 = vmatpush2.msra.mxu0 0.0
        %955 = vmatprep.subr.mxu0 0.0
        %956 = vmatpush2.msra.mxu0 0.0
        %957 = vmatprep.subr.mxu0 0.0
        %958 = vmatpush2.msra.mxu0 0.0
        %959 = vmatprep.subr.mxu0 0.0
        %960 = vmatpush2.msra.mxu0 0.0
        %961 = vmatprep.subr.mxu0 0.0
        %962 = vmatpush2.msra.mxu0 0.0
        %963 = vmatprep.subr.mxu0 0.0
        %964 = vmatpush2.msra.mxu0 0.0
        %965 = vmatprep.subr.mxu0 0.0
        %966 = vmatpush2.msra.mxu0 0.0
        %967 = vmatprep.subr.mxu0 0.0
        %968 = vmatpush2.msra.mxu0 0.0
        %969 = vmatprep.subr.mxu0 0.0
        %970 = vmatpush2.msra.mxu0 0.0
        %971 = vmatprep.subr.mxu0 0.0
        %972 = vmatpush2.msra.mxu0 0.0
        %973 = vmatprep.subr.mxu0 0.0
        %974 = vmatpush2.msra.mxu0 0.0
        %975 = vmatprep.mubr.f32.mxu0 0.0
        %976 = vmatmul.mubr.f32.gmra.mxu0 %v903
        %v977 = vpop.f32.mrf.mxu0
        %v978 = vadd.f32 %v881, %v977
        %v979 = vpop.f32.mrf.mxu0
        %v980 = vadd.f32 %v881, %v979
        %981 = vmatprep.mubr.f32.mxu0 0.0
        %982 = vmatmul.mubr.f32.gmra.mxu0 %v905
        %v983 = vpop.f32.mrf.mxu0
        %v984 = vadd.f32 %v885, %v983
        %v985 = vpop.f32.mrf.mxu0
        %v986 = vadd.f32 %v885, %v985
        %987 = vmatprep.mubr.f32.mxu0 0.0
        %988 = vmatmul.mubr.f32.gmra.mxu0 %v907
        %v989 = vpop.f32.mrf.mxu0
        %v990 = vadd.f32 %v889, %v989
        %v991 = vpop.f32.mrf.mxu0
        %v992 = vadd.f32 %v889, %v991
        %993 = vmatprep.mubr.f32.mxu0 0.0
        %994 = vmatmul.mubr.f32.gmra.mxu0 %v909
        %v995 = vpop.f32.mrf.mxu0
        %v996 = vadd.f32 %v893, %v995
        %v997 = vpop.f32.mrf.mxu0
        %v998 = vadd.f32 %v893, %v997
        %999 = vdwg.mxu0
        %1000 = vmatprep.subr.mxu0 0.0
        %1001 = vmatpush1.msra.mxu0 0.0
        %1002 = vmatprep.subr.mxu0 0.0
        %1003 = vmatpush1.msra.mxu0 0.0
        %1004 = vmatprep.subr.mxu0 0.0
        %1005 = vmatpush1.msra.mxu0 0.0
        %1006 = vmatprep.subr.mxu0 0.0
        %1007 = vmatpush1.msra.mxu0 0.0
        %1008 = vmatprep.subr.mxu0 0.0
        %1009 = vmatpush1.msra.mxu0 0.0
        %1010 = vmatprep.subr.mxu0 0.0
        %1011 = vmatpush1.msra.mxu0 0.0
        %1012 = vmatprep.subr.mxu0 0.0
        %1013 = vmatpush1.msra.mxu0 0.0
        %1014 = vmatprep.subr.mxu0 0.0
        %1015 = vmatpush1.msra.mxu0 0.0
        %1016 = vmatprep.subr.mxu0 0.0
        %1017 = vmatpush1.msra.mxu0 0.0
        %1018 = vmatprep.subr.mxu0 0.0
        %1019 = vmatpush1.msra.mxu0 0.0
        %1020 = vmatprep.subr.mxu0 0.0
        %1021 = vmatpush1.msra.mxu0 0.0
        %1022 = vmatprep.subr.mxu0 0.0
        %1023 = vmatpush1.msra.mxu0 0.0
        %1024 = vmatprep.subr.mxu0 %v878
        %1025 = vmatpush1.msra.mxu0 %v877
        %1026 = vmatprep.subr.mxu0 %v874
        %1027 = vmatpush1.msra.mxu0 %v873
        %1028 = vmatprep.subr.mxu0 %v870
        %1029 = vmatpush1.msra.mxu0 %v869
        %1030 = vmatprep.subr.mxu0 %v866
        %1031 = vmatpush1.msra.mxu0 %v865
        %1032 = vmatprep.subr.mxu0 0.0
        %1033 = vmatpush2.msra.mxu0 0.0
        %1034 = vmatprep.subr.mxu0 0.0
        %1035 = vmatpush2.msra.mxu0 0.0
        %1036 = vmatprep.subr.mxu0 0.0
        %1037 = vmatpush2.msra.mxu0 0.0
        %1038 = vmatprep.subr.mxu0 0.0
        %1039 = vmatpush2.msra.mxu0 0.0
        %1040 = vmatprep.subr.mxu0 0.0
        %1041 = vmatpush2.msra.mxu0 0.0
        %1042 = vmatprep.subr.mxu0 0.0
        %1043 = vmatpush2.msra.mxu0 0.0
        %1044 = vmatprep.subr.mxu0 0.0
        %1045 = vmatpush2.msra.mxu0 0.0
        %1046 = vmatprep.subr.mxu0 0.0
        %1047 = vmatpush2.msra.mxu0 0.0
        %1048 = vmatprep.subr.mxu0 0.0
        %1049 = vmatpush2.msra.mxu0 0.0
        %1050 = vmatprep.subr.mxu0 0.0
        %1051 = vmatpush2.msra.mxu0 0.0
        %1052 = vmatprep.subr.mxu0 0.0
        %1053 = vmatpush2.msra.mxu0 0.0
        %1054 = vmatprep.subr.mxu0 0.0
        %1055 = vmatpush2.msra.mxu0 0.0
        %1056 = vmatprep.subr.mxu0 0.0
        %1057 = vmatpush2.msra.mxu0 0.0
        %1058 = vmatprep.subr.mxu0 0.0
        %1059 = vmatpush2.msra.mxu0 0.0
        %1060 = vmatprep.subr.mxu0 0.0
        %1061 = vmatpush2.msra.mxu0 0.0
        %1062 = vmatprep.subr.mxu0 0.0
        %1063 = vmatpush2.msra.mxu0 0.0
        %1064 = vmatprep.mubr.f32.mxu0 0.0
        %1065 = vmatmul.mubr.f32.gmra.mxu0 %v903
        %v1066 = vpop.f32.mrf.mxu0
        %v1067 = vadd.f32 %v881, %v1066
        %v1068 = vpop.f32.mrf.mxu0
        %v1069 = vadd.f32 %v881, %v1068
        %1070 = vmatprep.mubr.f32.mxu0 0.0
        %1071 = vmatmul.mubr.f32.gmra.mxu0 %v905
        %v1072 = vpop.f32.mrf.mxu0
        %v1073 = vadd.f32 %v885, %v1072
        %v1074 = vpop.f32.mrf.mxu0
        %v1075 = vadd.f32 %v885, %v1074
        %1076 = vmatprep.mubr.f32.mxu0 0.0
        %1077 = vmatmul.mubr.f32.gmra.mxu0 %v907
        %v1078 = vpop.f32.mrf.mxu0
        %v1079 = vadd.f32 %v889, %v1078
        %v1080 = vpop.f32.mrf.mxu0
        %v1081 = vadd.f32 %v889, %v1080
        %1082 = vmatprep.mubr.f32.mxu0 0.0
        %1083 = vmatmul.mubr.f32.gmra.mxu0 %v909
        %v1084 = vpop.f32.mrf.mxu0
        %v1085 = vadd.f32 %v893, %v1084
        %v1086 = vpop.f32.mrf.mxu0
        %v1087 = vadd.f32 %v893, %v1086
        %1088 = vdwg.mxu0
        %v1089 = vand.u32 2147483647, %v978
        %v1090 = vand.u32 2147483647, %v980
        %v1091 = vand.u32 2147483647, %v1067
        %v1092 = vand.u32 2147483647, %v1069
        %v1093 = vand.u32 2147483647, %v984
        %v1094 = vand.u32 2147483647, %v986
        %v1095 = vand.u32 2147483647, %v1073
        %v1096 = vand.u32 2147483647, %v1075
        %v1097 = vand.u32 2147483647, %v990
        %v1098 = vand.u32 2147483647, %v992
        %v1099 = vand.u32 2147483647, %v1079
        %v1100 = vand.u32 2147483647, %v1081
        %v1101 = vand.u32 2147483647, %v996
        %v1102 = vand.u32 2147483647, %v998
        %v1103 = vand.u32 2147483647, %v1085
        %v1104 = vand.u32 2147483647, %v1087
        %v1105 = vld [vmem:[#allocation7] sm:$0xff]
        %1107 = vset.pattern.permute.xlu0 32
        %1108 = vperm.xlu0 %1107, %v1105
        %v1109 = vpop.permute.xlu0 %1108
        %v1111 = vsel %vm450, %v1105, 0
        %1113 = vmatprep.subr.mxu0 0.0
        %1114 = vmatpush1.msra.mxu0 0.0
        %1115 = vmatprep.subr.mxu0 0.0
        %1116 = vmatpush1.msra.mxu0 0.0
        %1117 = vmatprep.subr.mxu0 0.0
        %1118 = vmatpush1.msra.mxu0 0.0
        %1119 = vmatprep.subr.mxu0 0.0
        %1120 = vmatpush1.msra.mxu0 0.0
        %1121 = vmatprep.subr.mxu0 0.0
        %1122 = vmatpush1.msra.mxu0 0.0
        %1123 = vmatprep.subr.mxu0 0.0
        %1124 = vmatpush1.msra.mxu0 0.0
        %1125 = vmatprep.subr.mxu0 0.0
        %1126 = vmatpush1.msra.mxu0 0.0
        %1127 = vmatprep.subr.mxu0 0.0
        %1128 = vmatpush1.msra.mxu0 0.0
        %1129 = vmatprep.subr.mxu0 0.0
        %1130 = vmatpush1.msra.mxu0 0.0
        %1131 = vmatprep.subr.mxu0 0.0
        %1132 = vmatpush1.msra.mxu0 0.0
        %1133 = vmatprep.subr.mxu0 0.0
        %1134 = vmatpush1.msra.mxu0 0.0
        %1135 = vmatprep.subr.mxu0 0.0
        %1136 = vmatpush1.msra.mxu0 0.0
        %1137 = vmatprep.subr.mxu0 %v1102
        %1138 = vmatpush1.msra.mxu0 %v1101
        %1139 = vmatprep.subr.mxu0 %v1098
        %1140 = vmatpush1.msra.mxu0 %v1097
        %1141 = vmatprep.subr.mxu0 %v1094
        %1142 = vmatpush1.msra.mxu0 %v1093
        %1143 = vmatprep.subr.mxu0 %v1090
        %1144 = vmatpush1.msra.mxu0 %v1089
        %1145 = vmatprep.subr.mxu0 0.0
        %1146 = vmatpush2.msra.mxu0 0.0
        %1147 = vmatprep.subr.mxu0 0.0
        %1148 = vmatpush2.msra.mxu0 0.0
        %1149 = vmatprep.subr.mxu0 0.0
        %1150 = vmatpush2.msra.mxu0 0.0
        %1151 = vmatprep.subr.mxu0 0.0
        %1152 = vmatpush2.msra.mxu0 0.0
        %1153 = vmatprep.subr.mxu0 0.0
        %1154 = vmatpush2.msra.mxu0 0.0
        %1155 = vmatprep.subr.mxu0 0.0
        %1156 = vmatpush2.msra.mxu0 0.0
        %1157 = vmatprep.subr.mxu0 0.0
        %1158 = vmatpush2.msra.mxu0 0.0
        %1159 = vmatprep.subr.mxu0 0.0
        %1160 = vmatpush2.msra.mxu0 0.0
        %1161 = vmatprep.subr.mxu0 0.0
        %1162 = vmatpush2.msra.mxu0 0.0
        %1163 = vmatprep.subr.mxu0 0.0
        %1164 = vmatpush2.msra.mxu0 0.0
        %1165 = vmatprep.subr.mxu0 0.0
        %1166 = vmatpush2.msra.mxu0 0.0
        %1167 = vmatprep.subr.mxu0 0.0
        %1168 = vmatpush2.msra.mxu0 0.0
        %1169 = vmatprep.subr.mxu0 0.0
        %1170 = vmatpush2.msra.mxu0 0.0
        %1171 = vmatprep.subr.mxu0 0.0
        %1172 = vmatpush2.msra.mxu0 0.0
        %1173 = vmatprep.subr.mxu0 0.0
        %1174 = vmatpush2.msra.mxu0 0.0
        %1175 = vmatprep.subr.mxu0 0.0
        %1176 = vmatpush2.msra.mxu0 0.0
        %1177 = vmatprep.mubr.f32.mxu0 0.0
        %1178 = vmatmul.mubr.f32.gmra.mxu0 %v1111
        %v1179 = vpop.f32.mrf.mxu0
        %v1180 = vadd.f32 %v1109, %v1179
        %v1181 = vpop.f32.mrf.mxu0
        %v1182 = vadd.f32 %v1109, %v1181
        %1183 = vdwg.mxu0
        %1184 = vmatprep.subr.mxu0 0.0
        %1185 = vmatpush1.msra.mxu0 0.0
        %1186 = vmatprep.subr.mxu0 0.0
        %1187 = vmatpush1.msra.mxu0 0.0
        %1188 = vmatprep.subr.mxu0 0.0
        %1189 = vmatpush1.msra.mxu0 0.0
        %1190 = vmatprep.subr.mxu0 0.0
        %1191 = vmatpush1.msra.mxu0 0.0
        %1192 = vmatprep.subr.mxu0 0.0
        %1193 = vmatpush1.msra.mxu0 0.0
        %1194 = vmatprep.subr.mxu0 0.0
        %1195 = vmatpush1.msra.mxu0 0.0
        %1196 = vmatprep.subr.mxu0 0.0
        %1197 = vmatpush1.msra.mxu0 0.0
        %1198 = vmatprep.subr.mxu0 0.0
        %1199 = vmatpush1.msra.mxu0 0.0
        %1200 = vmatprep.subr.mxu0 0.0
        %1201 = vmatpush1.msra.mxu0 0.0
        %1202 = vmatprep.subr.mxu0 0.0
        %1203 = vmatpush1.msra.mxu0 0.0
        %1204 = vmatprep.subr.mxu0 0.0
        %1205 = vmatpush1.msra.mxu0 0.0
        %1206 = vmatprep.subr.mxu0 0.0
        %1207 = vmatpush1.msra.mxu0 0.0
        %1208 = vmatprep.subr.mxu0 %v1104
        %1209 = vmatpush1.msra.mxu0 %v1103
        %1210 = vmatprep.subr.mxu0 %v1100
        %1211 = vmatpush1.msra.mxu0 %v1099
        %1212 = vmatprep.subr.mxu0 %v1096
        %1213 = vmatpush1.msra.mxu0 %v1095
        %1214 = vmatprep.subr.mxu0 %v1092
        %1215 = vmatpush1.msra.mxu0 %v1091
        %1216 = vmatprep.subr.mxu0 0.0
        %1217 = vmatpush2.msra.mxu0 0.0
        %1218 = vmatprep.subr.mxu0 0.0
        %1219 = vmatpush2.msra.mxu0 0.0
        %1220 = vmatprep.subr.mxu0 0.0
        %1221 = vmatpush2.msra.mxu0 0.0
        %1222 = vmatprep.subr.mxu0 0.0
        %1223 = vmatpush2.msra.mxu0 0.0
        %1224 = vmatprep.subr.mxu0 0.0
        %1225 = vmatpush2.msra.mxu0 0.0
        %1226 = vmatprep.subr.mxu0 0.0
        %1227 = vmatpush2.msra.mxu0 0.0
        %1228 = vmatprep.subr.mxu0 0.0
        %1229 = vmatpush2.msra.mxu0 0.0
        %1230 = vmatprep.subr.mxu0 0.0
        %1231 = vmatpush2.msra.mxu0 0.0
        %1232 = vmatprep.subr.mxu0 0.0
        %1233 = vmatpush2.msra.mxu0 0.0
        %1234 = vmatprep.subr.mxu0 0.0
        %1235 = vmatpush2.msra.mxu0 0.0
        %1236 = vmatprep.subr.mxu0 0.0
        %1237 = vmatpush2.msra.mxu0 0.0
        %1238 = vmatprep.subr.mxu0 0.0
        %1239 = vmatpush2.msra.mxu0 0.0
        %1240 = vmatprep.subr.mxu0 0.0
        %1241 = vmatpush2.msra.mxu0 0.0
        %1242 = vmatprep.subr.mxu0 0.0
        %1243 = vmatpush2.msra.mxu0 0.0
        %1244 = vmatprep.subr.mxu0 0.0
        %1245 = vmatpush2.msra.mxu0 0.0
        %1246 = vmatprep.subr.mxu0 0.0
        %1247 = vmatpush2.msra.mxu0 0.0
        %1248 = vmatprep.mubr.f32.mxu0 0.0
        %1249 = vmatmul.mubr.f32.gmra.mxu0 %v1111
        %v1250 = vpop.f32.mrf.mxu0
        %v1251 = vadd.f32 %v1109, %v1250
        %v1252 = vpop.f32.mrf.mxu0
        %v1253 = vadd.f32 %v1109, %v1252
        %1254 = vdwg.mxu0
        %1255 = vst [vmem:[%s213] sm:$0xff] %v1180
        %1256 = vst [vmem:[%s213 + $0x8] sm:$0xff] %v1182
        %1257 = vst [vmem:[%s213 + $0x10] sm:$0xff] %v1251
        %1258 = vst [vmem:[%s213 + $0x18] sm:$0xff] %v1253
        %s1259 = sand.u32 %s97, 1
        %s1260 = scalar_lea.sflag [#allocation4], %s1259
        %s1261 = sand.u32 %s97, 1
        %s1262 = smul.addr %s1261, 32
        %s1263 = scalar_lea.vmem [#allocation8], %s1262
        // Predicated region
        $region45: #{tpu_custom_call.1} parent=31 // pred_check
          %p1264 = pneg %p107
        $region46: #{tpu_custom_call.1} parent=31 // pred_check_branch
          %1266 = sbr.rel (%p1264) target = $region48
        $region47: #{tpu_custom_call.1} parent=31 // pred_region
          %s1267 = smul.u32 4, %s21
          %s1269 = ssub.s32 512, 512
          %1270 = vsyncadd %s1260, %s1269
          %s1271 = smul.addr %s1267, 128
          %s1272 = scalar_lea.hbm %s3, %s1271
          %s1274 = sshll.u32 %s1263, 4
          %s1275 = int_to_ptr.vmem [resolvable:$true] %s1274
          %1277 = dma.vmem_to_hbm [thread:$0]  %s1275, 512, %s1272, %s1260
        $region48: #{tpu_custom_call.1} parent=31 // pred_fallthru
          _
      $region32: #{tpu_custom_call.1} parent=5 // pred_fallthru
        _
      %p1278 = scmp.le.s32.totalorder 2, %s16
      // Predicated region
      $region49: #{tpu_custom_call.1} parent=5 // pred_check
        %p1279 = pneg %p1278
      $region50: #{tpu_custom_call.1} parent=5 // pred_check_branch
        %1281 = sbr.rel (%p1279) target = $region52
      $region51: #{tpu_custom_call.1} parent=5 // pred_region
        %s1282 = ssub.s32 %s16, 2
        // Predicated region
        $region53: #{tpu_custom_call.1} parent=51 // pred_check
          %p1283 = pneg %p113
        $region54: #{tpu_custom_call.1} parent=51 // pred_check_branch
          %1285 = sbr.rel (%p1283) target = $region56
        $region55: #{tpu_custom_call.1} parent=51 // pred_region
          %s1286 = sand.u32 %s98, 1
          %s1287 = scalar_lea.sflag [#allocation4], %s1286
          %s1288 = sand.u32 %s98, 1
          %s1289 = smul.addr %s1288, 32
          %s1290 = scalar_lea.vmem [#allocation8], %s1289
          %1291 = dma.done %s1287, 512
        $region56: #{tpu_custom_call.1} parent=51 // pred_fallthru
          _
      $region52: #{tpu_custom_call.1} parent=5 // pred_fallthru
        _
    $region6: #{tpu_custom_call.1} parent=1 // loop_footer
      %s20 = sadd.s32 1, %s16
    $region7: #{tpu_custom_call.1} parent=1 // loop_footer_branch
      %15 = sbr.rel target = $region3
    $region8: #{tpu_custom_call.1} parent=1 // loop_exit
      _
    %1292 = vsyncpa [#allocation3], 1
    %s1293 = scalar_lea.sflag [#allocation3], 1
    %1294 = vsyncpa %s1293, 1
    %1295 = vsyncpa [#allocation6], 1
    %1296 = vsyncpa [#allocation4], 1
    %s1297 = scalar_lea.sflag [#allocation4], 1
    %1298 = vsyncpa %s1297, 1

</llo_original>
